<compile_context>
chip_gen: v7x
topology: tpu7x:2x2x1
jax: 0.10.0
libtpu: 0.0.40
codegen_flags: <defaults>
</compile_context>

<pallas_src>
from functools import partial
from math import sqrt

import jax
import jax.numpy as jnp
from jax import lax
from jax.experimental import pallas as pl
from jax.experimental.pallas import tpu as pltpu

_LANE = 128


# ----------------------------------------------------------------------------
# Small helpers
# ----------------------------------------------------------------------------
def _round_up(v: int, m: int) -> int:
    return ((v + m - 1) // m) * m


def _padded_bytes(shape, dtype) -> int:
    """VMEM bytes of one block after (sublane, lane) tile padding."""
    itemsize = jnp.dtype(dtype).itemsize
    sublane = 8 * max(1, 4 // itemsize)          # 8 (f32/i32), 16 (bf16), 32 (i8)
    dims = list(shape)
    dims[-1] = _round_up(dims[-1], _LANE)
    if len(dims) >= 2:
        dims[-2] = _round_up(dims[-2], sublane)
    n = 1
    for d in dims:
        n *= d
    return n * itemsize


def _vmem_capacity_bytes() -> int:
    """Physical VMEM of the local TPU; conservative (v7x-sized) fallback."""
    try:
        return int(pltpu.get_tpu_info().vmem_capacity_bytes)
    except Exception:  # older/newer jaxlib or non-TPU tracing context
        return 64 * 1024 * 1024


def _divisors_desc(n: int):
    return [d for d in range(n, 0, -1) if n % d == 0]


def _pick_n_tile(fout: int) -> int:
    """Full Fout when it is modest; otherwise a 128-aligned tile so one weight
    block stays a few MiB (MXU-friendly on all generations)."""
    if fout <= 2048:
        return fout
    for cand in (2048, 1024, 512, 256, 128):
        if fout % cand == 0:
            return cand
    return fout   # odd Fout: last-dim blocks must be full-extent


# ----------------------------------------------------------------------------
# Kernels
# ----------------------------------------------------------------------------
def _ensembled_linear_kernel(x_ref, w_ref, b_ref, o_ref, *, transpose_out):
    # One grid step owns an (Eblk, B, Fin) x slab and an (Eblk, Fin, nt) weight
    # slab.  Batched matmul on the MXU with f32 accumulation.
    if transpose_out:
        # (Eblk, nt, B): trailing dim is B -> lane-dense stores when B >= 128.
        out = lax.dot_general(
            w_ref[...], x_ref[...],
            dimension_numbers=(((1,), (2,)), ((0,), (0,))),
            preferred_element_type=jnp.float32)
        out = out + b_ref[...].astype(jnp.float32)      # (Eblk, nt, 1) over B
    else:
        out = lax.dot_general(
            x_ref[...], w_ref[...],
            dimension_numbers=(((2,), (1,)), ((0,), (0,))),
            preferred_element_type=jnp.float32)
        out = out + b_ref[...].astype(jnp.float32)      # (Eblk, 1, nt) over B
    o_ref[...] = out.astype(o_ref.dtype)


def _ensembled_linear_kernel_ktiled(x_ref, w_ref, b_ref, o_ref, acc_ref, *,
                                    transpose_out):
    # Fin is tiled: accumulate partial products in an f32 VMEM scratch; init at
    # k == 0, add bias + write back at the last k step.
    k = pl.program_id(2)

    @pl.when(k == 0)
    def _():
        acc_ref[...] = jnp.zeros_like(acc_ref)

    if transpose_out:
        acc_ref[...] += lax.dot_general(
            w_ref[...], x_ref[...],
            dimension_numbers=(((1,), (2,)), ((0,), (0,))),
            preferred_element_type=jnp.float32)
    else:
        acc_ref[...] += lax.dot_general(
            x_ref[...], w_ref[...],
            dimension_numbers=(((2,), (1,)), ((0,), (0,))),
            preferred_element_type=jnp.float32)

    @pl.when(k == pl.num_programs(2) - 1)
    def _():
        o_ref[...] = (acc_ref[...] + b_ref[...].astype(jnp.float32)).astype(o_ref.dtype)


# ----------------------------------------------------------------------------
# Wrapper
# ----------------------------------------------------------------------------
def ensembled_linear(x: jax.Array, weight: jax.Array, bias: jax.Array, *,
                     e_block: int | None = None,
                     n_tile: int | None = None,
                     k_tile: int | None = None,
                     vmem_budget_bytes: int | None = None,
                     out_orientation: str = "auto",
                     weight_buffer_count: int | None = None) -> jax.Array:
    """out[e] = x[e] @ weight[e] + bias[e], computed inside a Pallas TPU kernel."""
    E, B, Fin = x.shape
    Ew, Fin_w, Fout = weight.shape
    assert E == Ew and Fin == Fin_w
    assert bias.shape == (E, 1, Fout)
    out_dtype = jnp.result_type(x.dtype, weight.dtype)

    # ---- output orientation (lane-dense store path without risky relayouts) --
    if out_orientation == "auto":
        if Fout % _LANE == 0:
            transpose_out = False          # already lane-dense, keep (E,B,Fout)
        elif B % _LANE == 0:
            transpose_out = True           # B gives a lane-dense trailing dim
        else:
            transpose_out = B > Fout       # neither dense: use the wider one
    elif out_orientation == "bn":          # trailing dim = Fout
        transpose_out = False
    elif out_orientation == "nb":          # trailing dim = B
        transpose_out = True
    else:
        raise ValueError("out_orientation must be 'auto', 'bn' or 'nb'")

    # ---- generation-aware VMEM budget ----------------------------------------
    cap = _vmem_capacity_bytes()
    if vmem_budget_bytes is None:
        vmem_budget_bytes = (3 * cap) // 4            # 48 MiB v7x, 96 MiB v5e/v6e
    budget = min(vmem_budget_bytes, cap - (8 << 20))

    # ---- tile selection -------------------------------------------------------
    if n_tile is None:
        n_tile = _pick_n_tile(Fout)
    assert Fout % n_tile == 0
    assert n_tile == Fout or n_tile % _LANE == 0, \
        "n_tile must be the full Fout or a multiple of 128"

    def block_shapes(eb, kt, nt):
        x_blk = (eb, B, kt)
        w_blk = (eb, kt, nt)
        if transpose_out:
            b_blk, o_blk = (eb, nt, 1), (eb, nt, B)
        else:
            b_blk, o_blk = (eb, 1, nt), (eb, B, nt)
        return x_blk, w_blk, b_blk, o_blk

    def footprint(eb, kt, nt):
        # Double-buffered inputs/outputs + (single-buffered) f32 accumulator,
        # with (sublane, lane) layout padding included.
        x_blk, w_blk, b_blk, o_blk = block_shapes(eb, kt, nt)
        total = 2 * (_padded_bytes(x_blk, x.dtype)
                     + _padded_bytes(w_blk, weight.dtype)
                     + _padded_bytes(b_blk, bias.dtype)
                     + _padded_bytes(o_blk, out_dtype))
        if kt < Fin:
            total += _padded_bytes(o_blk, jnp.float32)
        return total

    # K (Fin) tiling only when even e_block = 1 would not fit the budget.
    if k_tile is None:
        k_cands = [Fin] + [c for c in (2048, 1024, 512, 256, 128)
                           if c < Fin and Fin % c == 0]
        k_tile = None
        for kt in k_cands:
            if footprint(1, kt, n_tile) <= budget:
                k_tile = kt
                break
        if k_tile is None:
            # TODO(synk): add a B (batch) tile for extremely large B*Fin blocks.
            raise ValueError("EnsembledLinear block exceeds the VMEM budget even "
                             "at e_block=1 with the smallest Fin tile; reduce "
                             "n_tile or add batch tiling.")
    assert Fin % k_tile == 0
    assert k_tile == Fin or k_tile % _LANE == 0, \
        "k_tile must be the full Fin or a multiple of 128"

    if e_block is None:
        e_block = 1
        for cand in _divisors_desc(E):
            if footprint(cand, k_tile, n_tile) <= budget:
                e_block = cand
                break
        # Keep >=2 steps on a "parallel" axis so both v7x TensorCores get work;
        # the extra grid step is ~0.35us, i.e. noise on single-TC v5e/v6e.
        if E >= 2 and (E // e_block) * (Fout // n_tile) < 2:
            e_block = max(d for d in _divisors_desc(E) if d <= E // 2)
    assert E % e_block == 0
    if footprint(e_block, k_tile, n_tile) > budget:
        raise ValueError("requested e_block/k_tile/n_tile exceed the VMEM budget")

    g_e, g_n, g_k = E // e_block, Fout // n_tile, Fin // k_tile
    k_tiled = g_k > 1
    x_blk, w_blk, b_blk, o_blk = block_shapes(e_block, k_tile, n_tile)

    if k_tiled:
        grid = (g_e, g_n, g_k)
        x_map = lambda e, n, k: (e, 0, k)
        w_map = lambda e, n, k: (e, k, n)
        if transpose_out:
            b_map = lambda e, n, k: (e, n, 0)
            o_map = lambda e, n, k: (e, n, 0)
        else:
            b_map = lambda e, n, k: (e, 0, n)
            o_map = lambda e, n, k: (e, 0, n)
        dims = ("parallel", "parallel", "arbitrary")
        kernel = partial(_ensembled_linear_kernel_ktiled, transpose_out=transpose_out)
        scratch = [pltpu.VMEM(o_blk, jnp.float32)]
    else:
        grid = (g_e, g_n)
        # x slab index_map ignores n -> DMA'd once per ensemble block, reused
        # across all Fout tiles.
        x_map = lambda e, n: (e, 0, 0)
        w_map = lambda e, n: (e, 0, n)
        if transpose_out:
            b_map = lambda e, n: (e, n, 0)
            o_map = lambda e, n: (e, n, 0)
        else:
            b_map = lambda e, n: (e, 0, n)
            o_map = lambda e, n: (e, 0, n)
        dims = ("parallel", "parallel")
        kernel = partial(_ensembled_linear_kernel, transpose_out=transpose_out)
        scratch = []

    w_spec_kwargs = {}
    if weight_buffer_count is not None:
        # Optional deeper pipelining of the weight stream (e.g. 3 on v5e if the
        # DMA is exposed); default depth-2 keeps VMEM tight on v7x.
        w_spec_kwargs["pipeline_mode"] = pl.Buffered(weight_buffer_count)

    in_specs = [
        pl.BlockSpec(x_blk, x_map),
        pl.BlockSpec(w_blk, w_map, **w_spec_kwargs),
        pl.BlockSpec(b_blk, b_map),
    ]
    out_specs = pl.BlockSpec(o_blk, o_map)

    bias_in = jnp.swapaxes(bias, 1, 2) if transpose_out else bias      # (E,Fout,1)
    out_full = (E, Fout, B) if transpose_out else (E, B, Fout)

    # vmem_limit: at least the (padded) block footprint, never above physical.
    needed = footprint(e_block, k_tile, n_tile) + (2 << 20)
    vmem_limit = max(needed, 32 << 20)
    vmem_limit = min(vmem_limit, cap - (8 << 20))
    vmem_limit = max(vmem_limit, needed)           # never clamp below the blocks

    cost = pl.CostEstimate(
        flops=2 * E * B * Fin * Fout,
        transcendentals=0,
        bytes_accessed=(x.size * x.dtype.itemsize
                        + weight.size * weight.dtype.itemsize
                        + bias.size * bias.dtype.itemsize
                        + E * B * Fout * jnp.dtype(out_dtype).itemsize),
    )

    out = pl.pallas_call(
        kernel,
        out_shape=jax.ShapeDtypeStruct(out_full, out_dtype),
        grid_spec=pltpu.PrefetchScalarGridSpec(
            num_scalar_prefetch=0,
            grid=grid,
            in_specs=in_specs,
            out_specs=out_specs,
            scratch_shapes=scratch,
        ),
        compiler_params=pltpu.CompilerParams(
            dimension_semantics=dims,
            vmem_limit_bytes=int(vmem_limit),
        ),
        cost_estimate=cost,
    )(x, weight, bias_in)

    return jnp.swapaxes(out, 1, 2) if transpose_out else out


# ----------------------------------------------------------------------------
# Parameter init mirroring EnsembledLinear.reset_parameters()
# ----------------------------------------------------------------------------
def init_params(key, in_features: int, out_features: int, ensemble_size: int):
    """kaiming_uniform_(a=sqrt(5)) applied per-member to the (in, out) slice:
    torch's fan_in for a 2-D (in, out) tensor is its second dim (= out_features),
    giving bound = 1/sqrt(out_features) for both weight and bias (faithful to
    the PyTorch module, even though it is not a standard Kaiming fan_in)."""
    kw, kb = jax.random.split(key)
    bound = 1.0 / sqrt(out_features)
    weight = jax.random.uniform(
        kw, (ensemble_size, in_features, out_features),
        minval=-bound, maxval=bound, dtype=jnp.float32)
    bias = jax.random.uniform(
        kb, (ensemble_size, 1, out_features),
        minval=-bound, maxval=bound, dtype=jnp.float32)
    return weight, bias


if __name__ == "__main__":
    key = jax.random.PRNGKey(0)
    k_x, k_p, k_x2, k_p2 = jax.random.split(key, 4)

    # Case 1: small demo shapes (typical ensemble MLP layer).
    E, B, Fin, Fout = 4, 8, 32, 32
    x = jax.random.normal(k_x, (E, B, Fin), dtype=jnp.float32)
    weight, bias = init_params(k_p, Fin, Fout, E)
    out = jax.block_until_ready(ensembled_linear(x, weight, bias))
    ref = jnp.einsum("ebi,eio->ebo", x, weight) + bias
    assert out.shape == (E, B, Fout)
    assert jnp.allclose(out, ref, atol=1e-5, rtol=1e-5)

    # Case 2: exercise the K (Fin) reduction tiling path explicitly.
    E2, B2, Fin2, Fout2 = 2, 8, 256, 32
    x2 = jax.random.normal(k_x2, (E2, B2, Fin2), dtype=jnp.float32)
    w2, b2 = init_params(k_p2, Fin2, Fout2, E2)
    out2 = jax.block_until_ready(ensembled_linear(x2, w2, b2, k_tile=128))
    ref2 = jnp.einsum("ebi,eio->ebo", x2, w2) + b2
    assert out2.shape == (E2, B2, Fout2)
    assert jnp.allclose(out2, ref2, atol=1e-4, rtol=1e-4)

    print("KERNEL_OK")
</pallas_src>

<mosaic_0001>
module attributes {stable_mosaic.version = 11 : i64} {
  func.func @_ensembled_linear_kernel(%arg0: i32, %arg1: i32, %arg2: memref<2x8x32xf32, #tpu.memory_space<vmem>>, %arg3: memref<2x32x32xf32, #tpu.memory_space<vmem>>, %arg4: memref<2x1x32xf32, #tpu.memory_space<vmem>>, %arg5: memref<2x8x32xf32, #tpu.memory_space<vmem>>) attributes {dimension_semantics = [#tpu.dimension_semantics<parallel>, #tpu.dimension_semantics<parallel>], iteration_bounds = array<i64: 2, 1>, scalar_prefetch = 0 : i64, scratch_operands = 0 : i64, tpu.core_type = #tpu.core_type<tc>, window_params = [{transform_indices = @transform_0, window_bounds = array<i64: 2, 8, 32>}, {transform_indices = @transform_1, window_bounds = array<i64: 2, 32, 32>}, {transform_indices = @transform_2, window_bounds = array<i64: 2, 1, 32>}, {transform_indices = @transform_3, window_bounds = array<i64: 2, 8, 32>}]} {
    %c0 = arith.constant 0 : index
    %c0_0 = arith.constant 0 : index
    %c0_1 = arith.constant 0 : index
    %0 = vector.load %arg2[%c0, %c0_0, %c0_1] : memref<2x8x32xf32, #tpu.memory_space<vmem>>, vector<2x8x32xf32>
    %c0_2 = arith.constant 0 : index
    %c0_3 = arith.constant 0 : index
    %c0_4 = arith.constant 0 : index
    %1 = vector.load %arg3[%c0_2, %c0_3, %c0_4] : memref<2x32x32xf32, #tpu.memory_space<vmem>>, vector<2x32x32xf32>
    %cst = arith.constant dense<0.000000e+00> : vector<2x8x32xf32>
    %2 = tpu.matmul %0, %1, %cst {dimension_numbers = #tpu.dot_dimension_numbers<[2], [1], [1], [2], [0, 0, 0, 1, 1, 2], [0], [0]>} : vector<2x8x32xf32>, vector<2x32x32xf32>, vector<2x8x32xf32> -> vector<2x8x32xf32>
    %c0_5 = arith.constant 0 : index
    %c0_6 = arith.constant 0 : index
    %c0_7 = arith.constant 0 : index
    %3 = vector.load %arg4[%c0_5, %c0_6, %c0_7] : memref<2x1x32xf32, #tpu.memory_space<vmem>>, vector<2x1x32xf32>
    %4 = vector.broadcast %3 : vector<2x1x32xf32> to vector<2x8x32xf32>
    %5 = arith.addf %2, %4 : vector<2x8x32xf32>
    %c0_8 = arith.constant 0 : index
    %c0_9 = arith.constant 0 : index
    %c0_10 = arith.constant 0 : index
    %6 = vector.load %arg5[%c0_8, %c0_9, %c0_10] : memref<2x8x32xf32, #tpu.memory_space<vmem>>, vector<2x8x32xf32>
    tpu.vector_store %arg5[%c0_8, %c0_9, %c0_10], %5 {strides = array<i32>} : memref<2x8x32xf32, #tpu.memory_space<vmem>>, vector<2x8x32xf32>,
    return
  }
  func.func @transform_0(%arg0: i32, %arg1: i32) -> (i32, i32, i32) {
    %c0_i32 = arith.constant 0 : i32
    %c0_i32_0 = arith.constant 0 : i32
    %c0_i32_1 = arith.constant 0 : i32
    return %arg0, %c0_i32, %c0_i32_0 : i32, i32, i32
  }
  func.func @transform_1(%arg0: i32, %arg1: i32) -> (i32, i32, i32) {
    %c0_i32 = arith.constant 0 : i32
    %c0_i32_0 = arith.constant 0 : i32
    return %arg0, %c0_i32, %arg1 : i32, i32, i32
  }
  func.func @transform_2(%arg0: i32, %arg1: i32) -> (i32, i32, i32) {
    %c0_i32 = arith.constant 0 : i32
    %c0_i32_0 = arith.constant 0 : i32
    return %arg0, %c0_i32, %arg1 : i32, i32, i32
  }
  func.func @transform_3(%arg0: i32, %arg1: i32) -> (i32, i32, i32) {
    %c0_i32 = arith.constant 0 : i32
    %c0_i32_0 = arith.constant 0 : i32
    return %arg0, %c0_i32, %arg1 : i32, i32, i32
  }
}

</mosaic_0001>

<llo_original>
// kernel: tpu_custom_call.1
$region0: #{tpu_custom_call.1}
  #allocation0 [shape = 'u32[]', space=smem, size = 0x4, offset = 0x4, fixed_abs, tag = 'smem constant byte address 0x4 - core index']
  #allocation1 [shape = 'u32[144,128]{1,0:T(1,128)}', space=vmem, size = 0x12000, scoped, tag = 'internal scratch']
  %s0 = inlined_call_operand.hbm [shape: f32[4,8,32], index: 0, kind: input, shape index: {}]
  %s1 = inlined_call_operand.hbm [shape: f32[4,32,32], index: 1, kind: input, shape index: {}]
  %s2 = inlined_call_operand.vmem [shape: f32[4,1,32], index: 2, kind: input, shape index: {}]
  %s3 = inlined_call_operand.hbm [shape: f32[4,8,32], index: 3, kind: output, shape index: {}]
  %s4 = sld [smem:[#allocation0]]
  $region53: #{tpu_custom_call.1} parent=0
    _
  %s6 = ssub.s32 1, %s4
  %s7 = scalar_select 0, %s6, %s4
  $region1: #{tpu_custom_call.1} parent=0
    #allocation2 [shape = 'u8[16384]{0}', space=vmem, size = 0x4000, scoped, tag = 'input window, operand 0']
    #allocation3 [shape = 's32[2]{0}', space=sflag, size = 0x8, scoped, tag = 'scoped memory for tpu_custom_call.1']
    #allocation4 [shape = 's32[2]{0}', space=sflag, size = 0x8, scoped, tag = 'scoped memory for tpu_custom_call.1']
    #allocation5 [shape = 'u8[65536]{0}', space=vmem, size = 0x10000, scoped, tag = 'input window, operand 1']
    #allocation6 [shape = 's32[2]{0}', space=sflag, size = 0x8, scoped, tag = 'scoped memory for tpu_custom_call.1']
    #allocation7 [shape = 'u8[16384]{0}', space=vmem, size = 0x4000, scoped, tag = 'output window, operand 0']
    %8 = vsyncpa [#allocation3], 0
    %s9 = scalar_lea.sflag [#allocation3], 1
    %10 = vsyncpa %s9, 0
    %11 = vsyncpa [#allocation6], 0
    %s12 = scalar_lea.sflag [#allocation6], 1
    %13 = vsyncpa %s12, 0
    %14 = vsyncpa [#allocation4], 0
    %s15 = scalar_lea.sflag [#allocation4], 1
    %16 = vsyncpa %s15, 0
    loop: start=0, step=1, limit=4
    $region2: #{tpu_custom_call.1} parent=1 // loop_pre_header
      _
    $region3: #{tpu_custom_call.1} parent=1 // loop_header
      %s18 = sphi 0, %s22
      %p19 = scmp.ge.s32.totalorder %s18, 4
      %s25 = sphi 0, %s37
      %s26 = sphi 0, %s33
      %s27 = sphi 0, %s25
      %s28 = sphi 0, %s26
      %s29 = sphi 0, %s27
      %s30 = sphi 0, %s28
      %s40 = sphi 0, %s42
      %s43 = sphi 0, %s40
      %s44 = sphi 0, %s43
      %s60 = sphi 0, %s44
      %s68 = sphi 0, %s70
      %s71 = sphi 0, %s68
      %s72 = sphi 0, %s71
      %s88 = sphi 0, %s72
      %s96 = sphi 0, %s98
      %s99 = sphi 0, %s96
      %s100 = sphi 0, %s99
      %s116 = sphi 0, %s100
      %s124 = sphi 0, %s126
      %s127 = sphi 0, %s124
      %s128 = sphi 0, %s127
      %s144 = sphi 0, %s128
    $region4: #{tpu_custom_call.1} parent=1 // loop_header_branch
      %21 = sbr.rel (%p19) target = $region8
    $region5: #{tpu_custom_call.1} parent=1 // loop_body
      %s23 = ssub.s32 %s18, 1
      %s24 = ssub.s32 %s18, 2
      %s31 = sadd.s32 1, %s26
      %p32 = scmp.ge.s32.totalorder %s31, 1
      %s33 = scalar_select %p32, 0, %s31
      %s34 = sadd.s32 1, %s25
      %s35 = scalar_select %p32, %s34, %s25
      %p36 = scmp.ge.s32.totalorder %s35, 2
      %s37 = scalar_select %p36, 0, %s35
      %s38 = ssub.s32 %s25, %s37
      %p39 = scmp.eq.s32.totalorder %s38, 0
      %s41 = sadd.s32 %s40, 1
      %s42 = scalar_select %p39, %s40, %s41
      %p45 = pneg %p39
      %p46 = scmp.eq.s32.totalorder %s18, 1
      %p47 = por %p45, %p46
      %p48 = scmp.ne.s32.totalorder %s40, %s43
      %p49 = scmp.eq.s32.totalorder %s18, 0
      %p50 = por %p48, %p49
      %p51 = scmp.ne.s32.totalorder %s40, %s43
      %p52 = scmp.eq.s32.totalorder %s23, 1
      %p53 = por %p51, %p52
      %p54 = scmp.ne.s32.totalorder %s43, %s44
      %p55 = scmp.eq.s32.totalorder %s23, 0
      %p56 = por %p54, %p55
      %p57 = scmp.ne.s32.totalorder %s43, %s44
      %p58 = scmp.eq.s32.totalorder %s24, 1
      %p59 = por %p57, %p58
      %p61 = scmp.ne.s32.totalorder %s44, %s60
      %p62 = scmp.eq.s32.totalorder %s24, 0
      %p63 = por %p61, %p62
      %s64 = ssub.s32 %s25, %s37
      %s65 = ssub.s32 %s26, %s33
      %s66 = sor.u32 %s64, %s65
      %p67 = scmp.eq.s32.totalorder %s66, 0
      %s69 = sadd.s32 %s68, 1
      %s70 = scalar_select %p67, %s68, %s69
      %p73 = pneg %p67
      %p74 = scmp.eq.s32.totalorder %s18, 1
      %p75 = por %p73, %p74
      %p76 = scmp.ne.s32.totalorder %s68, %s71
      %p77 = scmp.eq.s32.totalorder %s18, 0
      %p78 = por %p76, %p77
      %p79 = scmp.ne.s32.totalorder %s68, %s71
      %p80 = scmp.eq.s32.totalorder %s23, 1
      %p81 = por %p79, %p80
      %p82 = scmp.ne.s32.totalorder %s71, %s72
      %p83 = scmp.eq.s32.totalorder %s23, 0
      %p84 = por %p82, %p83
      %p85 = scmp.ne.s32.totalorder %s71, %s72
      %p86 = scmp.eq.s32.totalorder %s24, 1
      %p87 = por %p85, %p86
      %p89 = scmp.ne.s32.totalorder %s72, %s88
      %p90 = scmp.eq.s32.totalorder %s24, 0
      %p91 = por %p89, %p90
      %s92 = ssub.s32 %s25, %s37
      %s93 = ssub.s32 %s26, %s33
      %s94 = sor.u32 %s92, %s93
      %p95 = scmp.eq.s32.totalorder %s94, 0
      %s97 = sadd.s32 %s96, 1
      %s98 = scalar_select %p95, %s96, %s97
      %p101 = pneg %p95
      %p102 = scmp.eq.s32.totalorder %s18, 1
      %p103 = por %p101, %p102
      %p104 = scmp.ne.s32.totalorder %s96, %s99
      %p105 = scmp.eq.s32.totalorder %s18, 0
      %p106 = por %p104, %p105
      %p107 = scmp.ne.s32.totalorder %s96, %s99
      %p108 = scmp.eq.s32.totalorder %s23, 1
      %p109 = por %p107, %p108
      %p110 = scmp.ne.s32.totalorder %s99, %s100
      %p111 = scmp.eq.s32.totalorder %s23, 0
      %p112 = por %p110, %p111
      %p113 = scmp.ne.s32.totalorder %s99, %s100
      %p114 = scmp.eq.s32.totalorder %s24, 1
      %p115 = por %p113, %p114
      %p117 = scmp.ne.s32.totalorder %s100, %s116
      %p118 = scmp.eq.s32.totalorder %s24, 0
      %p119 = por %p117, %p118
      %s120 = ssub.s32 %s25, %s37
      %s121 = ssub.s32 %s26, %s33
      %s122 = sor.u32 %s120, %s121
      %p123 = scmp.eq.s32.totalorder %s122, 0
      %s125 = sadd.s32 %s124, 1
      %s126 = scalar_select %p123, %s124, %s125
      %p129 = pneg %p123
      %p130 = scmp.eq.s32.totalorder %s18, 1
      %p131 = por %p129, %p130
      %p132 = scmp.ne.s32.totalorder %s124, %s127
      %p133 = scmp.eq.s32.totalorder %s18, 0
      %p134 = por %p132, %p133
      %p135 = scmp.ne.s32.totalorder %s124, %s127
      %p136 = scmp.eq.s32.totalorder %s23, 1
      %p137 = por %p135, %p136
      %p138 = scmp.ne.s32.totalorder %s127, %s128
      %p139 = scmp.eq.s32.totalorder %s23, 0
      %p140 = por %p138, %p139
      %p141 = scmp.ne.s32.totalorder %s127, %s128
      %p142 = scmp.eq.s32.totalorder %s24, 1
      %p143 = por %p141, %p142
      %p145 = scmp.ne.s32.totalorder %s128, %s144
      %p146 = scmp.eq.s32.totalorder %s24, 0
      %p147 = por %p145, %p146
      %p148 = scmp.le.s32.totalorder 1, %s18
      %p149 = scmp.lt.s32.totalorder %s18, 3
      %p150 = pnand %p148, %p149
      %p151 = pneg %p150
      // Predicated region
      $region9: #{tpu_custom_call.1} parent=5 // pred_check
        _
      $region10: #{tpu_custom_call.1} parent=5 // pred_check_branch
        %153 = sbr.rel (%p150) target = $region12
      $region11: #{tpu_custom_call.1} parent=5 // pred_region
        %s154 = ssub.s32 %s18, 1
      $region12: #{tpu_custom_call.1} parent=5 // pred_fallthru
        _
      %p155 = scmp.lt.s32.totalorder %s18, 2
      // Predicated region
      $region13: #{tpu_custom_call.1} parent=5 // pred_check
        %p156 = pneg %p155
      $region14: #{tpu_custom_call.1} parent=5 // pred_check_branch
        %158 = sbr.rel (%p156) target = $region16
      $region15: #{tpu_custom_call.1} parent=5 // pred_region
        // Predicated region
        $region17: #{tpu_custom_call.1} parent=15 // pred_check
          %p159 = pneg %p50
        $region18: #{tpu_custom_call.1} parent=15 // pred_check_branch
          %161 = sbr.rel (%p159) target = $region20
        $region19: #{tpu_custom_call.1} parent=15 // pred_region
          %s162 = sand.u32 %s40, 1
          %s163 = scalar_lea.sflag [#allocation3], %s162
          %s164 = sand.u32 %s40, 1
          %s165 = smul.addr %s164, 16
          %s166 = scalar_lea.vmem [#allocation2], %s165
          %s167 = smul.u32 2, %s25
          %s169 = ssub.s32 256, 256
          %170 = vsyncadd %s163, %s169
          %s171 = smul.addr %s167, 128
          %s172 = scalar_lea.hbm %s0, %s171
          %s173 = sshll.u32 %s166, 4
          %s174 = int_to_ptr.vmem [resolvable:$true] %s173
          %179 = dma.hbm_to_vmem [thread:$0]  %s172, 256, %s174, %s163, 128, 128, 8
        $region20: #{tpu_custom_call.1} parent=15 // pred_fallthru
          _
        // Predicated region
        $region21: #{tpu_custom_call.1} parent=15 // pred_check
          %p180 = pneg %p78
        $region22: #{tpu_custom_call.1} parent=15 // pred_check_branch
          %182 = sbr.rel (%p180) target = $region24
        $region23: #{tpu_custom_call.1} parent=15 // pred_region
          %s183 = sand.u32 %s68, 1
          %s184 = scalar_lea.sflag [#allocation6], %s183
          %s185 = sand.u32 %s68, 1
          %s186 = smul.addr %s185, 64
          %s187 = scalar_lea.vmem [#allocation5], %s186
          %s188 = smul.u32 2, %s25
          %s190 = ssub.s32 1024, 1024
          %191 = vsyncadd %s184, %s190
          %s192 = smul.addr %s188, 4
          %s193 = sadd.s32 %s26, %s192
          %s194 = smul.addr %s193, 128
          %s195 = scalar_lea.hbm %s1, %s194
          %s196 = sshll.u32 %s187, 4
          %s197 = int_to_ptr.vmem [resolvable:$true] %s196
          %202 = dma.hbm_to_vmem [thread:$0]  %s195, 1024, %s197, %s184, 128, 128, 8
        $region24: #{tpu_custom_call.1} parent=15 // pred_fallthru
          _
        // Predicated region
        $region25: #{tpu_custom_call.1} parent=15 // pred_check
          %p203 = pneg %p106
        $region26: #{tpu_custom_call.1} parent=15 // pred_check_branch
          %205 = sbr.rel (%p203) target = $region28
        $region27: #{tpu_custom_call.1} parent=15 // pred_region
          %s206 = smul.u32 2, %s25
          %p207 = scmp.lt.s32.totalorder %s206, 3
          %s208 = scalar_select %p207, %s206, 3
          %p209 = scmp.lt.s32.totalorder %s26, 0
          %s210 = scalar_select %p209, %s26, 0
          %s211 = sadd.s32 %s210, %s208
          %s212 = scalar_lea.vmem %s2, %s211
          %s213 = smul.u32 2, %s25
        $region28: #{tpu_custom_call.1} parent=15 // pred_fallthru
          _
      $region16: #{tpu_custom_call.1} parent=5 // pred_fallthru
        _
      %p214 = scmp.le.s32.totalorder 1, %s18
      %p215 = scmp.lt.s32.totalorder %s18, 3
      %p216 = pnand %p214, %p215
      %p217 = pneg %p216
      // Predicated region
      $region29: #{tpu_custom_call.1} parent=5 // pred_check
        _
      $region30: #{tpu_custom_call.1} parent=5 // pred_check_branch
        %219 = sbr.rel (%p216) target = $region32
      $region31: #{tpu_custom_call.1} parent=5 // pred_region
        %s220 = ssub.s32 %s18, 1
        %s221 = sand.u32 %s43, 1
        %s222 = scalar_lea.sflag [#allocation3], %s221
        %s223 = sand.u32 %s43, 1
        %s224 = smul.addr %s223, 16
        %s225 = scalar_lea.vmem [#allocation2], %s224
        // Predicated region
        $region33: #{tpu_custom_call.1} parent=31 // pred_check
          %p226 = pneg %p56
        $region34: #{tpu_custom_call.1} parent=31 // pred_check_branch
          %228 = sbr.rel (%p226) target = $region36
        $region35: #{tpu_custom_call.1} parent=31 // pred_region
          %229 = dma.done %s222, 256
        $region36: #{tpu_custom_call.1} parent=31 // pred_fallthru
          _
        %s230 = sand.u32 %s71, 1
        %s231 = scalar_lea.sflag [#allocation6], %s230
        %s232 = sand.u32 %s71, 1
        %s233 = smul.addr %s232, 64
        %s234 = scalar_lea.vmem [#allocation5], %s233
        // Predicated region
        $region37: #{tpu_custom_call.1} parent=31 // pred_check
          %p235 = pneg %p84
        $region38: #{tpu_custom_call.1} parent=31 // pred_check_branch
          %237 = sbr.rel (%p235) target = $region40
        $region39: #{tpu_custom_call.1} parent=31 // pred_region
          %238 = dma.done %s231, 1024
        $region40: #{tpu_custom_call.1} parent=31 // pred_fallthru
          _
        %s239 = sand.u32 %s43, 1
        %s240 = scalar_lea.sflag [#allocation3], %s239
        %s241 = sand.u32 %s43, 1
        %s242 = smul.addr %s241, 16
        %s243 = scalar_lea.vmem [#allocation2], %s242
        %p244 = pneg %p56
        %p245 = pneg %p53
        %s246 = sand.u32 %s71, 1
        %s247 = scalar_lea.sflag [#allocation6], %s246
        %s248 = sand.u32 %s71, 1
        %s249 = smul.addr %s248, 64
        %s250 = scalar_lea.vmem [#allocation5], %s249
        %p251 = pneg %p84
        %p252 = pneg %p81
        %s253 = smul.u32 2, %s27
        %p254 = scmp.lt.s32.totalorder %s253, 3
        %s255 = scalar_select %p254, %s253, 3
        %p256 = scmp.lt.s32.totalorder %s28, 0
        %s257 = scalar_select %p256, %s28, 0
        %s258 = sadd.s32 %s257, %s255
        %s259 = scalar_lea.vmem %s2, %s258
        %p260 = pneg %p112
        %p261 = pneg %p109
        %p262 = pneg %p140
        %p263 = pneg %p137
        %s264 = sand.u32 %s127, 1
        %s265 = scalar_lea.sflag [#allocation4], %s264
        %s266 = sand.u32 %s127, 1
        %s267 = smul.addr %s266, 16
        %s268 = scalar_lea.vmem [#allocation7], %s267
        %s269 = smul.u32 2, %s27
        %s270 = smul.u32 2, %s27
        %s271 = smul.u32 2, %s27
        %p272 = scmp.lt.s32.totalorder %s271, 3
        %s273 = scalar_select %p272, %s271, 3
        %p274 = scmp.lt.s32.totalorder %s28, 0
        %s275 = scalar_select %p274, %s28, 0
        %s276 = sadd.s32 %s275, %s273
        %s277 = scalar_lea.vmem %s2, %s276
        %s278 = smul.u32 2, %s27
        %s279 = smul.u32 2, %s27
        %v280 = vld [vmem:[%s225] sm:$0xff]
        %v281 = vld [vmem:[%s225 + $0x8] sm:$0xff]
        %v282 = vld [vmem:[%s234] sm:$0xff]
        %v283 = vld [vmem:[%s234 + $0x8] sm:$0xff]
        %v284 = vld [vmem:[%s234 + $0x10] sm:$0xff]
        %v285 = vld [vmem:[%s234 + $0x18] sm:$0xff]
        %v286 = vld [vmem:[%s234 + $0x20] sm:$0xff]
        %v287 = vld [vmem:[%s234 + $0x28] sm:$0xff]
        %v288 = vld [vmem:[%s234 + $0x30] sm:$0xff]
        %v289 = vld [vmem:[%s234 + $0x38] sm:$0xff]
        %v290 = vld [vmem:[%s277] sm:$0x1]
        %v291 = vld [vmem:[%s277 + $0x1] sm:$0x1]
        %v294 = vlaneseq
        %v295 = vshrl.u32 %v294, 7
        %v296 = vsub.s32 0, %v295
        %v297 = vrot.slane %v290, %v296
        %v298 = vlaneseq
        %v299 = vshrl.u32 %v298, 7
        %v300 = vsub.s32 0, %v299
        %v301 = vrot.slane %v291, %v300
        %vm304 = vcmask 261120
        %v306 = vsel %vm304, %v280, 0
        %308 = vmatprep.subr.mxu0 0.0
        %309 = vmatpush1.msra.mxu0 %v282
        %310 = vmatprep.subr.mxu0 0.0
        %311 = vmatpush1.msra.mxu0 %v283
        %312 = vmatprep.subr.mxu0 0.0
        %313 = vmatpush1.msra.mxu0 %v284
        %314 = vmatprep.subr.mxu0 0.0
        %315 = vmatpush1.msra.mxu0 %v285
        %316 = vmatprep.subr.mxu0 0.0
        %317 = vmatpush1.msra.mxu0 0.0
        %318 = vmatprep.subr.mxu0 0.0
        %319 = vmatpush1.msra.mxu0 0.0
        %320 = vmatprep.subr.mxu0 0.0
        %321 = vmatpush1.msra.mxu0 0.0
        %322 = vmatprep.subr.mxu0 0.0
        %323 = vmatpush1.msra.mxu0 0.0
        %324 = vmatprep.subr.mxu0 0.0
        %325 = vmatpush1.msra.mxu0 0.0
        %326 = vmatprep.subr.mxu0 0.0
        %327 = vmatpush1.msra.mxu0 0.0
        %328 = vmatprep.subr.mxu0 0.0
        %329 = vmatpush1.msra.mxu0 0.0
        %330 = vmatprep.subr.mxu0 0.0
        %331 = vmatpush1.msra.mxu0 0.0
        %332 = vmatprep.subr.mxu0 0.0
        %333 = vmatpush1.msra.mxu0 0.0
        %334 = vmatprep.subr.mxu0 0.0
        %335 = vmatpush1.msra.mxu0 0.0
        %336 = vmatprep.subr.mxu0 0.0
        %337 = vmatpush1.msra.mxu0 0.0
        %338 = vmatprep.subr.mxu0 0.0
        %339 = vmatpush1.msra.mxu0 0.0
        %340 = vmatprep.subr.mxu0 0.0
        %341 = vmatpush1.msra.mxu0 0.0
        %342 = vmatprep.subr.mxu0 0.0
        %343 = vmatpush1.msra.mxu0 0.0
        %344 = vmatprep.subr.mxu0 0.0
        %345 = vmatpush1.msra.mxu0 0.0
        %346 = vmatprep.subr.mxu0 0.0
        %347 = vmatpush1.msra.mxu0 0.0
        %348 = vmatprep.subr.mxu0 0.0
        %349 = vmatpush1.msra.mxu0 0.0
        %350 = vmatprep.subr.mxu0 0.0
        %351 = vmatpush1.msra.mxu0 0.0
        %352 = vmatprep.subr.mxu0 0.0
        %353 = vmatpush1.msra.mxu0 0.0
        %354 = vmatprep.subr.mxu0 0.0
        %355 = vmatpush1.msra.mxu0 0.0
        %356 = vmatprep.subr.mxu0 0.0
        %357 = vmatpush1.msra.mxu0 0.0
        %358 = vmatprep.subr.mxu0 0.0
        %359 = vmatpush1.msra.mxu0 0.0
        %360 = vmatprep.subr.mxu0 0.0
        %361 = vmatpush1.msra.mxu0 0.0
        %362 = vmatprep.subr.mxu0 0.0
        %363 = vmatpush1.msra.mxu0 0.0
        %364 = vmatprep.subr.mxu0 0.0
        %365 = vmatpush1.msra.mxu0 0.0
        %366 = vmatprep.subr.mxu0 0.0
        %367 = vmatpush1.msra.mxu0 0.0
        %368 = vmatprep.subr.mxu0 0.0
        %369 = vmatpush1.msra.mxu0 0.0
        %370 = vmatprep.subr.mxu0 0.0
        %371 = vmatpush1.msra.mxu0 0.0
        %372 = vmatprep.mubr.f32.mxu0 0.0
        %373 = vmatmul.mubr.f32.gmra.mrb[0].mxu0 %v306
        %v374 = vpop.f32.mrb[0].mxu0
        %v375 = vadd.f32 %v297, %v374
        %v376 = vpop.f32.mrb[0].mxu0
        %377 = vdwg.mxu0
        %v379 = vsel %vm304, %v281, 0
        %381 = vmatprep.subr.mxu0 0.0
        %382 = vmatpush1.msra.mxu0 %v286
        %383 = vmatprep.subr.mxu0 0.0
        %384 = vmatpush1.msra.mxu0 %v287
        %385 = vmatprep.subr.mxu0 0.0
        %386 = vmatpush1.msra.mxu0 %v288
        %387 = vmatprep.subr.mxu0 0.0
        %388 = vmatpush1.msra.mxu0 %v289
        %389 = vmatprep.subr.mxu0 0.0
        %390 = vmatpush1.msra.mxu0 0.0
        %391 = vmatprep.subr.mxu0 0.0
        %392 = vmatpush1.msra.mxu0 0.0
        %393 = vmatprep.subr.mxu0 0.0
        %394 = vmatpush1.msra.mxu0 0.0
        %395 = vmatprep.subr.mxu0 0.0
        %396 = vmatpush1.msra.mxu0 0.0
        %397 = vmatprep.subr.mxu0 0.0
        %398 = vmatpush1.msra.mxu0 0.0
        %399 = vmatprep.subr.mxu0 0.0
        %400 = vmatpush1.msra.mxu0 0.0
        %401 = vmatprep.subr.mxu0 0.0
        %402 = vmatpush1.msra.mxu0 0.0
        %403 = vmatprep.subr.mxu0 0.0
        %404 = vmatpush1.msra.mxu0 0.0
        %405 = vmatprep.subr.mxu0 0.0
        %406 = vmatpush1.msra.mxu0 0.0
        %407 = vmatprep.subr.mxu0 0.0
        %408 = vmatpush1.msra.mxu0 0.0
        %409 = vmatprep.subr.mxu0 0.0
        %410 = vmatpush1.msra.mxu0 0.0
        %411 = vmatprep.subr.mxu0 0.0
        %412 = vmatpush1.msra.mxu0 0.0
        %413 = vmatprep.subr.mxu0 0.0
        %414 = vmatpush1.msra.mxu0 0.0
        %415 = vmatprep.subr.mxu0 0.0
        %416 = vmatpush1.msra.mxu0 0.0
        %417 = vmatprep.subr.mxu0 0.0
        %418 = vmatpush1.msra.mxu0 0.0
        %419 = vmatprep.subr.mxu0 0.0
        %420 = vmatpush1.msra.mxu0 0.0
        %421 = vmatprep.subr.mxu0 0.0
        %422 = vmatpush1.msra.mxu0 0.0
        %423 = vmatprep.subr.mxu0 0.0
        %424 = vmatpush1.msra.mxu0 0.0
        %425 = vmatprep.subr.mxu0 0.0
        %426 = vmatpush1.msra.mxu0 0.0
        %427 = vmatprep.subr.mxu0 0.0
        %428 = vmatpush1.msra.mxu0 0.0
        %429 = vmatprep.subr.mxu0 0.0
        %430 = vmatpush1.msra.mxu0 0.0
        %431 = vmatprep.subr.mxu0 0.0
        %432 = vmatpush1.msra.mxu0 0.0
        %433 = vmatprep.subr.mxu0 0.0
        %434 = vmatpush1.msra.mxu0 0.0
        %435 = vmatprep.subr.mxu0 0.0
        %436 = vmatpush1.msra.mxu0 0.0
        %437 = vmatprep.subr.mxu0 0.0
        %438 = vmatpush1.msra.mxu0 0.0
        %439 = vmatprep.subr.mxu0 0.0
        %440 = vmatpush1.msra.mxu0 0.0
        %441 = vmatprep.subr.mxu0 0.0
        %442 = vmatpush1.msra.mxu0 0.0
        %443 = vmatprep.subr.mxu0 0.0
        %444 = vmatpush1.msra.mxu0 0.0
        %445 = vmatprep.mubr.f32.mxu0 0.0
        %446 = vmatmul.mubr.f32.gmra.mrb[0].mxu0 %v379
        %v447 = vpop.f32.mrb[0].mxu0
        %v448 = vadd.f32 %v301, %v447
        %v449 = vpop.f32.mrb[0].mxu0
        %450 = vdwg.mxu0
        %451 = vst.msk [vmem:[%s268] sm:$0xff] %vm304, %v375
        %452 = vst.msk [vmem:[%s268 + $0x8] sm:$0xff] %vm304, %v448
        %s453 = sand.u32 %s127, 1
        %s454 = scalar_lea.sflag [#allocation4], %s453
        %s455 = sand.u32 %s127, 1
        %s456 = smul.addr %s455, 16
        %s457 = scalar_lea.vmem [#allocation7], %s456
        // Predicated region
        $region41: #{tpu_custom_call.1} parent=31 // pred_check
          %p458 = pneg %p137
        $region42: #{tpu_custom_call.1} parent=31 // pred_check_branch
          %460 = sbr.rel (%p458) target = $region44
        $region43: #{tpu_custom_call.1} parent=31 // pred_region
          %s461 = smul.u32 2, %s27
          %s463 = ssub.s32 256, 256
          %464 = vsyncadd %s454, %s463
          %s465 = sadd.s32 %s28, %s461
          %s466 = smul.addr %s465, 128
          %s467 = scalar_lea.hbm %s3, %s466
          %s468 = sshll.u32 %s457, 4
          %s469 = int_to_ptr.vmem [resolvable:$true] %s468
          %474 = dma.vmem_to_hbm [thread:$0]  %s469, 256, %s467, %s454, 128, 128, 8
        $region44: #{tpu_custom_call.1} parent=31 // pred_fallthru
          _
      $region32: #{tpu_custom_call.1} parent=5 // pred_fallthru
        _
      %p475 = scmp.le.s32.totalorder 2, %s18
      // Predicated region
      $region45: #{tpu_custom_call.1} parent=5 // pred_check
        %p476 = pneg %p475
      $region46: #{tpu_custom_call.1} parent=5 // pred_check_branch
        %478 = sbr.rel (%p476) target = $region48
      $region47: #{tpu_custom_call.1} parent=5 // pred_region
        %s479 = ssub.s32 %s18, 2
        // Predicated region
        $region49: #{tpu_custom_call.1} parent=47 // pred_check
          %p480 = pneg %p143
        $region50: #{tpu_custom_call.1} parent=47 // pred_check_branch
          %482 = sbr.rel (%p480) target = $region52
        $region51: #{tpu_custom_call.1} parent=47 // pred_region
          %s483 = sand.u32 %s128, 1
          %s484 = scalar_lea.sflag [#allocation4], %s483
          %s485 = sand.u32 %s128, 1
          %s486 = smul.addr %s485, 16
          %s487 = scalar_lea.vmem [#allocation7], %s486
          %488 = dma.done %s484, 256
        $region52: #{tpu_custom_call.1} parent=47 // pred_fallthru
          _
      $region48: #{tpu_custom_call.1} parent=5 // pred_fallthru
        _
    $region6: #{tpu_custom_call.1} parent=1 // loop_footer
      %s22 = sadd.s32 1, %s18
    $region7: #{tpu_custom_call.1} parent=1 // loop_footer_branch
      %17 = sbr.rel target = $region3
    $region8: #{tpu_custom_call.1} parent=1 // loop_exit
      _
    %489 = vsyncpa [#allocation3], 1
    %s490 = scalar_lea.sflag [#allocation3], 1
    %491 = vsyncpa %s490, 1
    %492 = vsyncpa [#allocation6], 1
    %s493 = scalar_lea.sflag [#allocation6], 1
    %494 = vsyncpa %s493, 1
    %495 = vsyncpa [#allocation4], 1
    %s496 = scalar_lea.sflag [#allocation4], 1
    %497 = vsyncpa %s496, 1

</llo_original>
